<compile_context>
chip_gen: v6e
topology: v6e:2x2x1
jax: 0.10.0
libtpu: 0.0.40
codegen_flags: <defaults>
</compile_context>

<pallas_src>
import functools

import numpy as np
import jax
import jax.numpy as jnp
from jax.experimental import pallas as pl
from jax.experimental.pallas import tpu as pltpu


# ---------------------------------------------------------------------------
# Fused Pallas kernel: (A_tile @ W + b) -> log_softmax over classes
# ---------------------------------------------------------------------------

def _link_kernel(a_ref, w_ref, b_ref, out_ref):
    # a_ref: (tm, N) tile of the dense adjacency
    # w_ref: (N, C)  linear weight, pre-transposed
    # b_ref: (1, C)  linear bias
    logits = (
        jnp.dot(a_ref[...], w_ref[...], preferred_element_type=jnp.float32)
        + b_ref[...]
    )                                                   # (tm, C), f32
    # log_softmax over dim=1 (classes on lanes), numerically stable
    m = jnp.max(logits, axis=1, keepdims=True)          # (tm, 1)
    z = logits - m
    lse = jnp.log(jnp.sum(jnp.exp(z), axis=1, keepdims=True))
    out_ref[...] = (z - lse).astype(out_ref.dtype)


def link_forward(adj, w_t, b, *, tm=64):
    """Fused LINK forward: log_softmax(adj @ w_t + b, axis=1).

    adj : (N, N) dense adjacency (f32)
    w_t : (N, C) weight (transposed nn.Linear weight)
    b   : (1, C) bias
    """
    n = adj.shape[0]
    c = w_t.shape[1]
    assert n % tm == 0, "demo sizes chosen so N is divisible by the row tile"
    return pl.pallas_call(
        _link_kernel,
        out_shape=jax.ShapeDtypeStruct((n, c), jnp.float32),
        grid_spec=pltpu.PrefetchScalarGridSpec(
            num_scalar_prefetch=0,
            grid=(n // tm,),
            in_specs=[
                pl.BlockSpec((tm, n), lambda i: (i, 0)),   # stream adjacency row tiles
                pl.BlockSpec((n, c), lambda i: (0, 0)),    # weight resident across steps
                pl.BlockSpec((1, c), lambda i: (0, 0)),    # bias resident across steps
            ],
            out_specs=pl.BlockSpec((tm, c), lambda i: (i, 0)),
        ),
        compiler_params=pltpu.CompilerParams(
            dimension_semantics=("parallel",),             # rows shard across TCs (v7x)
        ),
    )(adj, w_t, b)


# ---------------------------------------------------------------------------
# Host-side glue: dense adjacency from edge_index, parameter init
# ---------------------------------------------------------------------------

def dense_adjacency(edge_index, n, dtype=jnp.float32):
    """A[row, col] += 1 per edge — matches SparseTensor(row, col).to_torch_sparse_coo
    followed by a (duplicate-summing) sparse matmul."""
    # TODO(synk): sparse-COO construction/scatter stays in plain JAX; tiny random
    # scatter has no efficient Pallas equivalent and is one-time preprocessing.
    row, col = edge_index[0], edge_index[1]
    ones = jnp.ones(row.shape[0], dtype)
    return jnp.zeros((n, n), dtype).at[row, col].add(ones)


def init_link_params(key, n, num_classes):
    """PyTorch nn.Linear(N, num_classes) default init: U(-1/sqrt(N), 1/sqrt(N))."""
    k1, k2 = jax.random.split(key)
    bound = 1.0 / np.sqrt(n)
    w_t = jax.random.uniform(k1, (n, num_classes), jnp.float32, -bound, bound)
    b = jax.random.uniform(k2, (1, num_classes), jnp.float32, -bound, bound)
    return w_t, b


# ---------------------------------------------------------------------------
# Demo
# ---------------------------------------------------------------------------

if __name__ == "__main__":
    N = 128            # number of nodes (and Linear fan-in)
    NUM_CLASSES = 8
    NUM_EDGES = 512

    key = jax.random.PRNGKey(0)
    k_e, k_p = jax.random.split(key, 2)

    edge_index = jax.random.randint(k_e, (2, NUM_EDGES), 0, N, dtype=jnp.int32)
    adj = dense_adjacency(edge_index, N, jnp.float32)
    w_t, b = init_link_params(k_p, N, NUM_CLASSES)

    out = link_forward(adj, w_t, b, tm=64)
    out = jax.block_until_ready(out)

    assert out.shape == (N, NUM_CLASSES), out.shape
    assert bool(jnp.all(jnp.isfinite(out)))
    # rows of log_softmax must exponentiate to 1
    row_sums = jnp.sum(jnp.exp(out), axis=1)
    assert bool(jnp.all(jnp.abs(row_sums - 1.0) < 1e-4)), row_sums
    print("KERNEL_OK")
</pallas_src>

<mosaic_0001>
module attributes {stable_mosaic.version = 11 : i64} {
  func.func @_link_kernel(%arg0: i32, %arg1: memref<64x128xf32, #tpu.memory_space<vmem>>, %arg2: memref<128x8xf32, #tpu.memory_space<vmem>>, %arg3: memref<1x8xf32, #tpu.memory_space<vmem>>, %arg4: memref<64x8xf32, #tpu.memory_space<vmem>>) attributes {dimension_semantics = [#tpu.dimension_semantics<parallel>], iteration_bounds = array<i64: 2>, scalar_prefetch = 0 : i64, scratch_operands = 0 : i64, tpu.core_type = #tpu.core_type<tc>, window_params = [{transform_indices = @transform_0, window_bounds = array<i64: 64, 128>}, {pipeline_mode = #tpu.pipeline_mode<synchronous>, transform_indices = @transform_1, window_bounds = array<i64: 128, 8>}, {pipeline_mode = #tpu.pipeline_mode<synchronous>, transform_indices = @transform_2, window_bounds = array<i64: 1, 8>}, {transform_indices = @transform_3, window_bounds = array<i64: 64, 8>}]} {
    %c0 = arith.constant 0 : index
    %c0_0 = arith.constant 0 : index
    %0 = vector.load %arg1[%c0, %c0_0] : memref<64x128xf32, #tpu.memory_space<vmem>>, vector<64x128xf32>
    %c0_1 = arith.constant 0 : index
    %c0_2 = arith.constant 0 : index
    %1 = vector.load %arg2[%c0_1, %c0_2] : memref<128x8xf32, #tpu.memory_space<vmem>>, vector<128x8xf32>
    %cst = arith.constant dense<0.000000e+00> : vector<64x8xf32>
    %2 = tpu.matmul %0, %1, %cst {dimension_numbers = #tpu.dot_dimension_numbers<[1], [0], [0], [1], [0, 0, 1, 1], [], []>} : vector<64x128xf32>, vector<128x8xf32>, vector<64x8xf32> -> vector<64x8xf32>
    %c0_3 = arith.constant 0 : index
    %c0_4 = arith.constant 0 : index
    %3 = vector.load %arg3[%c0_3, %c0_4] : memref<1x8xf32, #tpu.memory_space<vmem>>, vector<1x8xf32>
    %4 = vector.broadcast %3 : vector<1x8xf32> to vector<64x8xf32>
    %5 = arith.addf %2, %4 : vector<64x8xf32>
    %cst_5 = arith.constant dense<0xFF800000> : vector<64xf32>
    %6 = vector.multi_reduction <maximumf>, %5, %cst_5 [1] : vector<64x8xf32> to vector<64xf32>
    %7 = vector.shape_cast %6 : vector<64xf32> to vector<64x1xf32>
    %8 = vector.broadcast %7 : vector<64x1xf32> to vector<64x8xf32>
    %9 = arith.subf %5, %8 : vector<64x8xf32>
    %10 = math.exp %9 : vector<64x8xf32>
    %cst_6 = arith.constant dense<0.000000e+00> : vector<64xf32>
    %11 = vector.multi_reduction <add>, %10, %cst_6 [1] : vector<64x8xf32> to vector<64xf32>
    %12 = vector.shape_cast %11 : vector<64xf32> to vector<64x1xf32>
    %13 = math.log %12 : vector<64x1xf32>
    %14 = vector.broadcast %13 : vector<64x1xf32> to vector<64x8xf32>
    %15 = arith.subf %9, %14 : vector<64x8xf32>
    %c0_7 = arith.constant 0 : index
    %c0_8 = arith.constant 0 : index
    %16 = vector.load %arg4[%c0_7, %c0_8] : memref<64x8xf32, #tpu.memory_space<vmem>>, vector<64x8xf32>
    tpu.vector_store %arg4[%c0_7, %c0_8], %15 {strides = array<i32>} : memref<64x8xf32, #tpu.memory_space<vmem>>, vector<64x8xf32>,
    return
  }
  func.func @transform_0(%arg0: i32) -> (i32, i32) {
    %c0_i32 = arith.constant 0 : i32
    %c0_i32_0 = arith.constant 0 : i32
    return %arg0, %c0_i32 : i32, i32
  }
  func.func @transform_1(%arg0: i32) -> (i32, i32) {
    %c0_i32 = arith.constant 0 : i32
    %c0_i32_0 = arith.constant 0 : i32
    %c0_i32_1 = arith.constant 0 : i32
    return %c0_i32, %c0_i32_0 : i32, i32
  }
  func.func @transform_2(%arg0: i32) -> (i32, i32) {
    %c0_i32 = arith.constant 0 : i32
    %c0_i32_0 = arith.constant 0 : i32
    %c0_i32_1 = arith.constant 0 : i32
    return %c0_i32, %c0_i32_0 : i32, i32
  }
  func.func @transform_3(%arg0: i32) -> (i32, i32) {
    %c0_i32 = arith.constant 0 : i32
    %c0_i32_0 = arith.constant 0 : i32
    return %arg0, %c0_i32 : i32, i32
  }
}

</mosaic_0001>

<llo_original>
// kernel: tpu_custom_call.1
$region0: #{tpu_custom_call.1}
  #allocation0 [shape = 'u32[]', space=smem, size = 0x4, offset = 0x4, fixed_abs, tag = 'smem constant byte address 0x4 - core index']
  #allocation1 [shape = 'u32[144,128]{1,0:T(1,128)}', space=vmem, size = 0x12000, scoped, tag = 'internal scratch']
  %s0 = inlined_call_operand.vmem [shape: f32[128,128], index: 0, kind: input, shape index: {}]
  %s1 = inlined_call_operand.vmem [shape: f32[128,8], index: 1, kind: input, shape index: {}]
  %s2 = inlined_call_operand.vmem [shape: f32[1,8], index: 2, kind: input, shape index: {}]
  %s3 = inlined_call_operand.vmem [shape: f32[128,8], index: 3, kind: output, shape index: {}]
  %s4 = sld [smem:[#allocation0]]
  $region45: #{tpu_custom_call.1} parent=0
    _
  %s6 = ssub.s32 1, %s4
  %s7 = scalar_select 0, %s6, %s4
  loop: start=0, step=1, limit=4
  $region2: #{tpu_custom_call.1} parent=0 // loop_pre_header
    _
  $region3: #{tpu_custom_call.1} parent=0 // loop_header
    %s9 = sphi 0, %s13
    %p10 = scmp.ge.s32.totalorder %s9, 4
    %s19 = sphi 0, %s21
    %s22 = sphi 0, %s19
    %s23 = sphi 0, %s22
    %s39 = sphi 0, %s23
    %s43 = sphi 0, %s43
    %s45 = sphi 0, %s43
    %s46 = sphi 0, %s45
    %s60 = sphi 0, %s46
    %s64 = sphi 0, %s64
    %s66 = sphi 0, %s64
    %s67 = sphi 0, %s66
    %s81 = sphi 0, %s67
    %s87 = sphi 0, %s89
    %s90 = sphi 0, %s87
    %s91 = sphi 0, %s90
    %s107 = sphi 0, %s91
  $region4: #{tpu_custom_call.1} parent=0 // loop_header_branch
    %12 = sbr.rel (%p10) target = $region8
  $region5: #{tpu_custom_call.1} parent=0 // loop_body
    %s14 = ssub.s32 %s9, 1
    %s15 = ssub.s32 %s9, 2
    %s16 = sadd.s32 %s9, 1
    %s17 = ssub.s32 %s9, %s16
    %p18 = scmp.eq.s32.totalorder %s17, 0
    %s20 = sadd.s32 %s19, 1
    %s21 = scalar_select %p18, %s19, %s20
    %p24 = pneg %p18
    %p25 = scmp.eq.s32.totalorder %s9, 1
    %p26 = por %p24, %p25
    %p27 = scmp.ne.s32.totalorder %s19, %s22
    %p28 = scmp.eq.s32.totalorder %s9, 0
    %p29 = por %p27, %p28
    %p30 = scmp.ne.s32.totalorder %s19, %s22
    %p31 = scmp.eq.s32.totalorder %s14, 1
    %p32 = por %p30, %p31
    %p33 = scmp.ne.s32.totalorder %s22, %s23
    %p34 = scmp.eq.s32.totalorder %s14, 0
    %p35 = por %p33, %p34
    %p36 = scmp.ne.s32.totalorder %s22, %s23
    %p37 = scmp.eq.s32.totalorder %s15, 1
    %p38 = por %p36, %p37
    %p40 = scmp.ne.s32.totalorder %s23, %s39
    %p41 = scmp.eq.s32.totalorder %s15, 0
    %p42 = por %p40, %p41
    %s44 = sadd.s32 %s43, 1
    %p47 = scmp.eq.s32.totalorder %s9, 1
    %p48 = scmp.ne.s32.totalorder %s43, %s45
    %p49 = scmp.eq.s32.totalorder %s9, 0
    %p50 = por %p48, %p49
    %p51 = scmp.ne.s32.totalorder %s43, %s45
    %p52 = scmp.eq.s32.totalorder %s14, 1
    %p53 = por %p51, %p52
    %p54 = scmp.ne.s32.totalorder %s45, %s46
    %p55 = scmp.eq.s32.totalorder %s14, 0
    %p56 = por %p54, %p55
    %p57 = scmp.ne.s32.totalorder %s45, %s46
    %p58 = scmp.eq.s32.totalorder %s15, 1
    %p59 = por %p57, %p58
    %p61 = scmp.ne.s32.totalorder %s46, %s60
    %p62 = scmp.eq.s32.totalorder %s15, 0
    %p63 = por %p61, %p62
    %s65 = sadd.s32 %s64, 1
    %p68 = scmp.eq.s32.totalorder %s9, 1
    %p69 = scmp.ne.s32.totalorder %s64, %s66
    %p70 = scmp.eq.s32.totalorder %s9, 0
    %p71 = por %p69, %p70
    %p72 = scmp.ne.s32.totalorder %s64, %s66
    %p73 = scmp.eq.s32.totalorder %s14, 1
    %p74 = por %p72, %p73
    %p75 = scmp.ne.s32.totalorder %s66, %s67
    %p76 = scmp.eq.s32.totalorder %s14, 0
    %p77 = por %p75, %p76
    %p78 = scmp.ne.s32.totalorder %s66, %s67
    %p79 = scmp.eq.s32.totalorder %s15, 1
    %p80 = por %p78, %p79
    %p82 = scmp.ne.s32.totalorder %s67, %s81
    %p83 = scmp.eq.s32.totalorder %s15, 0
    %p84 = por %p82, %p83
    %s85 = ssub.s32 %s9, %s16
    %p86 = scmp.eq.s32.totalorder %s85, 0
    %s88 = sadd.s32 %s87, 1
    %s89 = scalar_select %p86, %s87, %s88
    %p92 = pneg %p86
    %p93 = scmp.eq.s32.totalorder %s9, 1
    %p94 = por %p92, %p93
    %p95 = scmp.ne.s32.totalorder %s87, %s90
    %p96 = scmp.eq.s32.totalorder %s9, 0
    %p97 = por %p95, %p96
    %p98 = scmp.ne.s32.totalorder %s87, %s90
    %p99 = scmp.eq.s32.totalorder %s14, 1
    %p100 = por %p98, %p99
    %p101 = scmp.ne.s32.totalorder %s90, %s91
    %p102 = scmp.eq.s32.totalorder %s14, 0
    %p103 = por %p101, %p102
    %p104 = scmp.ne.s32.totalorder %s90, %s91
    %p105 = scmp.eq.s32.totalorder %s15, 1
    %p106 = por %p104, %p105
    %p108 = scmp.ne.s32.totalorder %s91, %s107
    %p109 = scmp.eq.s32.totalorder %s15, 0
    %p110 = por %p108, %p109
    %p111 = scmp.le.s32.totalorder 1, %s9
    %p112 = scmp.lt.s32.totalorder %s9, 3
    %p113 = pnand %p111, %p112
    %p114 = pneg %p113
    // Predicated region
    $region9: #{tpu_custom_call.1} parent=5 // pred_check
      _
    $region10: #{tpu_custom_call.1} parent=5 // pred_check_branch
      %116 = sbr.rel (%p113) target = $region12
    $region11: #{tpu_custom_call.1} parent=5 // pred_region
      %s117 = ssub.s32 %s9, 1
      // Predicated region
      $region13: #{tpu_custom_call.1} parent=11 // pred_check
        %p118 = pneg %p56
      $region14: #{tpu_custom_call.1} parent=11 // pred_check_branch
        %120 = sbr.rel (%p118) target = $region16
      $region15: #{tpu_custom_call.1} parent=11 // pred_region
        _
      $region16: #{tpu_custom_call.1} parent=11 // pred_fallthru
        _
      // Predicated region
      $region17: #{tpu_custom_call.1} parent=11 // pred_check
        %p121 = pneg %p77
      $region18: #{tpu_custom_call.1} parent=11 // pred_check_branch
        %123 = sbr.rel (%p121) target = $region20
      $region19: #{tpu_custom_call.1} parent=11 // pred_region
        _
      $region20: #{tpu_custom_call.1} parent=11 // pred_fallthru
        _
    $region12: #{tpu_custom_call.1} parent=5 // pred_fallthru
      _
    %p124 = scmp.lt.s32.totalorder %s9, 2
    // Predicated region
    $region21: #{tpu_custom_call.1} parent=5 // pred_check
      %p125 = pneg %p124
    $region22: #{tpu_custom_call.1} parent=5 // pred_check_branch
      %127 = sbr.rel (%p125) target = $region24
    $region23: #{tpu_custom_call.1} parent=5 // pred_region
      // Predicated region
      $region25: #{tpu_custom_call.1} parent=23 // pred_check
        %p128 = pneg %p29
      $region26: #{tpu_custom_call.1} parent=23 // pred_check_branch
        %130 = sbr.rel (%p128) target = $region28
      $region27: #{tpu_custom_call.1} parent=23 // pred_region
        %s131 = smul.u32 8, %s9
        %p132 = scmp.lt.s32.totalorder %s131, 15
        %s133 = scalar_select %p132, %s131, 15
        %s134 = smul.addr %s133, 8
        %s135 = scalar_lea.vmem %s0, %s134
        %s136 = smul.u32 8, %s9
      $region28: #{tpu_custom_call.1} parent=23 // pred_fallthru
        _
    $region24: #{tpu_custom_call.1} parent=5 // pred_fallthru
      _
    %p137 = scmp.le.s32.totalorder 1, %s9
    %p138 = scmp.lt.s32.totalorder %s9, 3
    %p139 = pnand %p137, %p138
    %p140 = pneg %p139
    // Predicated region
    $region29: #{tpu_custom_call.1} parent=5 // pred_check
      _
    $region30: #{tpu_custom_call.1} parent=5 // pred_check_branch
      %142 = sbr.rel (%p139) target = $region32
    $region31: #{tpu_custom_call.1} parent=5 // pred_region
      %s143 = ssub.s32 %s9, 1
      %s144 = smul.u32 8, %s14
      %p145 = scmp.lt.s32.totalorder %s144, 15
      %s146 = scalar_select %p145, %s144, 15
      %s147 = smul.addr %s146, 8
      %s148 = scalar_lea.vmem %s0, %s147
      %p149 = pneg %p35
      %p150 = pneg %p32
      %p151 = pneg %p56
      %p152 = pneg %p53
      %p153 = pneg %p77
      %p154 = pneg %p74
      %p155 = pneg %p103
      %p156 = pneg %p100
      %s157 = smul.u32 8, %s14
      %p158 = scmp.lt.s32.totalorder %s157, 15
      %s159 = scalar_select %p158, %s157, 15
      %s160 = smul.addr %s159, 8
      %s161 = scalar_lea.vmem %s3, %s160
      %s162 = smul.u32 8, %s14
      %p163 = scmp.lt.s32.totalorder %s162, 15
      %s164 = scalar_select %p163, %s162, 15
      %s165 = smul.addr %s164, 8
      %s166 = scalar_lea.vmem %s0, %s165
      %s167 = smul.u32 8, %s14
      %s168 = smul.u32 8, %s14
      %p169 = scmp.lt.s32.totalorder %s168, 15
      %s170 = scalar_select %p169, %s168, 15
      %s171 = smul.addr %s170, 8
      %s172 = scalar_lea.vmem %s3, %s171
      %s173 = smul.u32 8, %s14
      %v174 = vld [vmem:[%s166] sm:$0xff]
      %v175 = vld [vmem:[%s166 + $0x8] sm:$0xff]
      %v176 = vld [vmem:[%s166 + $0x10] sm:$0xff]
      %v177 = vld [vmem:[%s166 + $0x18] sm:$0xff]
      %v178 = vld [vmem:[%s166 + $0x20] sm:$0xff]
      %v179 = vld [vmem:[%s166 + $0x28] sm:$0xff]
      %v180 = vld [vmem:[%s166 + $0x30] sm:$0xff]
      %v181 = vld [vmem:[%s166 + $0x38] sm:$0xff]
      %v182 = vld [vmem:[%s1] sm:$0xff]
      %v183 = vld [vmem:[%s1 + $0x8] sm:$0xff]
      %v184 = vld [vmem:[%s1 + $0x10] sm:$0xff]
      %v185 = vld [vmem:[%s1 + $0x18] sm:$0xff]
      %v186 = vld [vmem:[%s1 + $0x20] sm:$0xff]
      %v187 = vld [vmem:[%s1 + $0x28] sm:$0xff]
      %v188 = vld [vmem:[%s1 + $0x30] sm:$0xff]
      %v189 = vld [vmem:[%s1 + $0x38] sm:$0xff]
      %v190 = vld [vmem:[%s1 + $0x40] sm:$0xff]
      %v191 = vld [vmem:[%s1 + $0x48] sm:$0xff]
      %v192 = vld [vmem:[%s1 + $0x50] sm:$0xff]
      %v193 = vld [vmem:[%s1 + $0x58] sm:$0xff]
      %v194 = vld [vmem:[%s1 + $0x60] sm:$0xff]
      %v195 = vld [vmem:[%s1 + $0x68] sm:$0xff]
      %v196 = vld [vmem:[%s1 + $0x70] sm:$0xff]
      %v197 = vld [vmem:[%s1 + $0x78] sm:$0xff]
      %v198 = vld [vmem:[%s2] sm:$0x1]
      %v200 = vlaneseq
      %v201 = vshrl.u32 %v200, 7
      %v202 = vsub.s32 0, %v201
      %v203 = vrot.slane %v198, %v202
      %205 = vmatprep.subr.mxu0 0.0
      %206 = vmatpush1.msra.mxu0 %v197
      %207 = vmatprep.subr.mxu0 0.0
      %208 = vmatpush1.msra.mxu0 %v196
      %209 = vmatprep.subr.mxu0 0.0
      %210 = vmatpush1.msra.mxu0 %v195
      %211 = vmatprep.subr.mxu0 0.0
      %212 = vmatpush1.msra.mxu0 %v194
      %213 = vmatprep.subr.mxu0 0.0
      %214 = vmatpush1.msra.mxu0 %v193
      %215 = vmatprep.subr.mxu0 0.0
      %216 = vmatpush1.msra.mxu0 %v192
      %217 = vmatprep.subr.mxu0 0.0
      %218 = vmatpush1.msra.mxu0 %v191
      %219 = vmatprep.subr.mxu0 0.0
      %220 = vmatpush1.msra.mxu0 %v190
      %221 = vmatprep.subr.mxu0 0.0
      %222 = vmatpush1.msra.mxu0 %v189
      %223 = vmatprep.subr.mxu0 0.0
      %224 = vmatpush1.msra.mxu0 %v188
      %225 = vmatprep.subr.mxu0 0.0
      %226 = vmatpush1.msra.mxu0 %v187
      %227 = vmatprep.subr.mxu0 0.0
      %228 = vmatpush1.msra.mxu0 %v186
      %229 = vmatprep.subr.mxu0 0.0
      %230 = vmatpush1.msra.mxu0 %v185
      %231 = vmatprep.subr.mxu0 0.0
      %232 = vmatpush1.msra.mxu0 %v184
      %233 = vmatprep.subr.mxu0 0.0
      %234 = vmatpush1.msra.mxu0 %v183
      %235 = vmatprep.subr.mxu0 0.0
      %236 = vmatpush1.msra.mxu0 %v182
      %237 = vmatprep.subr.mxu0 0.0
      %238 = vmatpush2.msra.mxu0 0.0
      %239 = vmatprep.subr.mxu0 0.0
      %240 = vmatpush2.msra.mxu0 0.0
      %241 = vmatprep.subr.mxu0 0.0
      %242 = vmatpush2.msra.mxu0 0.0
      %243 = vmatprep.subr.mxu0 0.0
      %244 = vmatpush2.msra.mxu0 0.0
      %245 = vmatprep.subr.mxu0 0.0
      %246 = vmatpush2.msra.mxu0 0.0
      %247 = vmatprep.subr.mxu0 0.0
      %248 = vmatpush2.msra.mxu0 0.0
      %249 = vmatprep.subr.mxu0 0.0
      %250 = vmatpush2.msra.mxu0 0.0
      %251 = vmatprep.subr.mxu0 0.0
      %252 = vmatpush2.msra.mxu0 0.0
      %253 = vmatprep.subr.mxu0 0.0
      %254 = vmatpush2.msra.mxu0 0.0
      %255 = vmatprep.subr.mxu0 0.0
      %256 = vmatpush2.msra.mxu0 0.0
      %257 = vmatprep.subr.mxu0 0.0
      %258 = vmatpush2.msra.mxu0 0.0
      %259 = vmatprep.subr.mxu0 0.0
      %260 = vmatpush2.msra.mxu0 0.0
      %261 = vmatprep.subr.mxu0 0.0
      %262 = vmatpush2.msra.mxu0 0.0
      %263 = vmatprep.subr.mxu0 0.0
      %264 = vmatpush2.msra.mxu0 0.0
      %265 = vmatprep.subr.mxu0 0.0
      %266 = vmatpush2.msra.mxu0 0.0
      %267 = vmatprep.subr.mxu0 0.0
      %268 = vmatpush2.msra.mxu0 0.0
      %269 = vmatprep.mubr.f32.mxu0 0.0
      %270 = vmatmul.mubr.f32.gmra.mxu0 %v174
      %v271 = vpop.f32.mrf.mxu0
      %v272 = vadd.f32 %v203, %v271
      %v273 = vpop.f32.mrf.mxu0
      %274 = vmatprep.mubr.f32.mxu0 0.0
      %275 = vmatmul.mubr.f32.gmra.mxu0 %v175
      %v276 = vpop.f32.mrf.mxu0
      %v277 = vadd.f32 %v203, %v276
      %v278 = vpop.f32.mrf.mxu0
      %279 = vmatprep.mubr.f32.mxu0 0.0
      %280 = vmatmul.mubr.f32.gmra.mxu0 %v176
      %v281 = vpop.f32.mrf.mxu0
      %v282 = vadd.f32 %v203, %v281
      %v283 = vpop.f32.mrf.mxu0
      %284 = vmatprep.mubr.f32.mxu0 0.0
      %285 = vmatmul.mubr.f32.gmra.mxu0 %v177
      %v286 = vpop.f32.mrf.mxu0
      %v287 = vadd.f32 %v203, %v286
      %v288 = vpop.f32.mrf.mxu0
      %289 = vmatprep.mubr.f32.mxu0 0.0
      %290 = vmatmul.mubr.f32.gmra.mxu0 %v178
      %v291 = vpop.f32.mrf.mxu0
      %v292 = vadd.f32 %v203, %v291
      %v293 = vpop.f32.mrf.mxu0
      %294 = vmatprep.mubr.f32.mxu0 0.0
      %295 = vmatmul.mubr.f32.gmra.mxu0 %v179
      %v296 = vpop.f32.mrf.mxu0
      %v297 = vadd.f32 %v203, %v296
      %v298 = vpop.f32.mrf.mxu0
      %299 = vmatprep.mubr.f32.mxu0 0.0
      %300 = vmatmul.mubr.f32.gmra.mxu0 %v180
      %v301 = vpop.f32.mrf.mxu0
      %v302 = vadd.f32 %v203, %v301
      %v303 = vpop.f32.mrf.mxu0
      %304 = vmatprep.mubr.f32.mxu0 0.0
      %305 = vmatmul.mubr.f32.gmra.mxu0 %v181
      %v306 = vpop.f32.mrf.mxu0
      %v307 = vadd.f32 %v203, %v306
      %v308 = vpop.f32.mrf.mxu0
      %309 = vdwg.mxu0
      %vm310 = vcmask 64512
      %v311 = vsel %vm310, %v272, -inf
      %312 = vmax.xlane.f32.xlu0 %v311
      %v313 = vpop.xlane.xlu0 %312
      %v314 = vsel %vm310, %v277, -inf
      %315 = vmax.xlane.f32.xlu0 %v314
      %v316 = vpop.xlane.xlu0 %315
      %v317 = vsel %vm310, %v282, -inf
      %318 = vmax.xlane.f32.xlu0 %v317
      %v319 = vpop.xlane.xlu0 %318
      %v320 = vsel %vm310, %v287, -inf
      %321 = vmax.xlane.f32.xlu0 %v320
      %v322 = vpop.xlane.xlu0 %321
      %v323 = vsel %vm310, %v292, -inf
      %324 = vmax.xlane.f32.xlu0 %v323
      %v325 = vpop.xlane.xlu0 %324
      %v326 = vsel %vm310, %v297, -inf
      %327 = vmax.xlane.f32.xlu0 %v326
      %v328 = vpop.xlane.xlu0 %327
      %v329 = vsel %vm310, %v302, -inf
      %330 = vmax.xlane.f32.xlu0 %v329
      %v331 = vpop.xlane.xlu0 %330
      %v332 = vsel %vm310, %v307, -inf
      %333 = vmax.xlane.f32.xlu0 %v332
      %v334 = vpop.xlane.xlu0 %333
      %v335 = vsub.f32 %v272, %v313
      %v336 = vsub.f32 %v277, %v316
      %v337 = vsub.f32 %v282, %v319
      %v338 = vsub.f32 %v287, %v322
      %v339 = vsub.f32 %v292, %v325
      %v340 = vsub.f32 %v297, %v328
      %v341 = vsub.f32 %v302, %v331
      %v342 = vsub.f32 %v307, %v334
      %v343 = vmul.f32 %v335, 1.442695
      %v344 = vpow.pop %v343
      %v345 = vmul.f32 %v336, 1.442695
      %v346 = vpow.pop %v345
      %v347 = vmul.f32 %v337, 1.442695
      %v348 = vpow.pop %v347
      %v349 = vmul.f32 %v338, 1.442695
      %v350 = vpow.pop %v349
      %v351 = vmul.f32 %v339, 1.442695
      %v352 = vpow.pop %v351
      %v353 = vmul.f32 %v340, 1.442695
      %v354 = vpow.pop %v353
      %v355 = vmul.f32 %v341, 1.442695
      %v356 = vpow.pop %v355
      %v357 = vmul.f32 %v342, 1.442695
      %v358 = vpow.pop %v357
      %v359 = vsel %vm310, %v344, 0.0
      %360 = vadd.xlane.f32.xlu0 %v359
      %v361 = vpop.xlane.xlu0 %360
      %v362 = vsel %vm310, %v346, 0.0
      %363 = vadd.xlane.f32.xlu0 %v362
      %v364 = vpop.xlane.xlu0 %363
      %v365 = vsel %vm310, %v348, 0.0
      %366 = vadd.xlane.f32.xlu0 %v365
      %v367 = vpop.xlane.xlu0 %366
      %v368 = vsel %vm310, %v350, 0.0
      %369 = vadd.xlane.f32.xlu0 %v368
      %v370 = vpop.xlane.xlu0 %369
      %v371 = vsel %vm310, %v352, 0.0
      %372 = vadd.xlane.f32.xlu0 %v371
      %v373 = vpop.xlane.xlu0 %372
      %v374 = vsel %vm310, %v354, 0.0
      %375 = vadd.xlane.f32.xlu0 %v374
      %v376 = vpop.xlane.xlu0 %375
      %v377 = vsel %vm310, %v356, 0.0
      %378 = vadd.xlane.f32.xlu0 %v377
      %v379 = vpop.xlane.xlu0 %378
      %v380 = vsel %vm310, %v358, 0.0
      %381 = vadd.xlane.f32.xlu0 %v380
      %v382 = vpop.xlane.xlu0 %381
      %v383 = vlog2.pop %v361
      %v384 = vmul.f32 %v383, 0.6931472
      %v385 = vlog2.pop %v364
      %v386 = vmul.f32 %v385, 0.6931472
      %v387 = vlog2.pop %v367
      %v388 = vmul.f32 %v387, 0.6931472
      %v389 = vlog2.pop %v370
      %v390 = vmul.f32 %v389, 0.6931472
      %v391 = vlog2.pop %v373
      %v392 = vmul.f32 %v391, 0.6931472
      %v393 = vlog2.pop %v376
      %v394 = vmul.f32 %v393, 0.6931472
      %v395 = vlog2.pop %v379
      %v396 = vmul.f32 %v395, 0.6931472
      %v397 = vlog2.pop %v382
      %v398 = vmul.f32 %v397, 0.6931472
      %v399 = vsub.f32 %v335, %v384
      %v400 = vsub.f32 %v336, %v386
      %v401 = vsub.f32 %v337, %v388
      %v402 = vsub.f32 %v338, %v390
      %v403 = vsub.f32 %v339, %v392
      %v404 = vsub.f32 %v340, %v394
      %v405 = vsub.f32 %v341, %v396
      %v406 = vsub.f32 %v342, %v398
      %407 = vst.msk [vmem:[%s172] sm:$0xff] %vm310, %v399
      %408 = vst.msk [vmem:[%s172 + $0x8] sm:$0xff] %vm310, %v400
      %409 = vst.msk [vmem:[%s172 + $0x10] sm:$0xff] %vm310, %v401
      %410 = vst.msk [vmem:[%s172 + $0x18] sm:$0xff] %vm310, %v402
      %411 = vst.msk [vmem:[%s172 + $0x20] sm:$0xff] %vm310, %v403
      %412 = vst.msk [vmem:[%s172 + $0x28] sm:$0xff] %vm310, %v404
      %413 = vst.msk [vmem:[%s172 + $0x30] sm:$0xff] %vm310, %v405
      %414 = vst.msk [vmem:[%s172 + $0x38] sm:$0xff] %vm310, %v406
      %s415 = smul.u32 8, %s14
      %p416 = scmp.lt.s32.totalorder %s415, 15
      %s417 = scalar_select %p416, %s415, 15
      %s418 = smul.addr %s417, 8
      %s419 = scalar_lea.vmem %s3, %s418
      // Predicated region
      $region33: #{tpu_custom_call.1} parent=31 // pred_check
        %p420 = pneg %p100
      $region34: #{tpu_custom_call.1} parent=31 // pred_check_branch
        %422 = sbr.rel (%p420) target = $region36
      $region35: #{tpu_custom_call.1} parent=31 // pred_region
        %s423 = smul.u32 8, %s14
      $region36: #{tpu_custom_call.1} parent=31 // pred_fallthru
        _
    $region32: #{tpu_custom_call.1} parent=5 // pred_fallthru
      _
    %p424 = scmp.le.s32.totalorder 2, %s9
    // Predicated region
    $region37: #{tpu_custom_call.1} parent=5 // pred_check
      %p425 = pneg %p424
    $region38: #{tpu_custom_call.1} parent=5 // pred_check_branch
      %427 = sbr.rel (%p425) target = $region40
    $region39: #{tpu_custom_call.1} parent=5 // pred_region
      %s428 = ssub.s32 %s9, 2
      // Predicated region
      $region41: #{tpu_custom_call.1} parent=39 // pred_check
        %p429 = pneg %p106
      $region42: #{tpu_custom_call.1} parent=39 // pred_check_branch
        %431 = sbr.rel (%p429) target = $region44
      $region43: #{tpu_custom_call.1} parent=39 // pred_region
        %s432 = smul.u32 8, %s15
        %p433 = scmp.lt.s32.totalorder %s432, 15
        %s434 = scalar_select %p433, %s432, 15
        %s435 = smul.addr %s434, 8
        %s436 = scalar_lea.vmem %s3, %s435
      $region44: #{tpu_custom_call.1} parent=39 // pred_fallthru
        _
    $region40: #{tpu_custom_call.1} parent=5 // pred_fallthru
      _
  $region6: #{tpu_custom_call.1} parent=0 // loop_footer
    %s13 = sadd.s32 1, %s9
  $region7: #{tpu_custom_call.1} parent=0 // loop_footer_branch
    %8 = sbr.rel target = $region3
  $region8: #{tpu_custom_call.1} parent=0 // loop_exit
    _

</llo_original>
